<compile_context>
chip_gen: v7x
topology: tpu7x:2x2x1
jax: 0.10.0
libtpu: 0.0.40
codegen_flags: <defaults>
</compile_context>

<pallas_src>
import functools

import jax
import jax.numpy as jnp
from jax.experimental import pallas as pl
from jax.experimental.pallas import tpu as pltpu


def _wce_kernel(logits_ref, label_ref, weight_ref, out_ref, acc_ref,
                *, hw_total, tile_hw, need_mask):
    j = pl.program_id(1)
    nj = pl.num_programs(1)

    # Per-batch accumulator: re-initialized at the start of every b's j-sweep so the
    # b axis is safely "parallel" (megacore split on v7x).
    @pl.when(j == 0)
    def _():
        acc_ref[...] = jnp.zeros_like(acc_ref)

    x = logits_ref[...].astype(jnp.float32)        # (1, C, T)  classes on sublanes
    lab = label_ref[...]                            # (1, 1, T)  int32
    w = weight_ref[...].astype(jnp.float32)         # (1, 1, T)

    # log-softmax over the class (sublane) axis, numerically stable.
    m = jnp.max(x, axis=1, keepdims=True)                                  # (1,1,T)
    lse = jnp.log(jnp.sum(jnp.exp(x - m), axis=1, keepdims=True))          # (1,1,T)

    # Gather the target-class logit via a one-hot select (iota == label).
    classes = jax.lax.broadcasted_iota(jnp.int32, x.shape, 1)              # (1,C,T)
    onehot = classes == lab                                                # (1,C,T)
    x_t = jnp.sum(jnp.where(onehot, x, 0.0), axis=1, keepdims=True)        # (1,1,T)

    nll = -(x_t - m - lse)                                                 # (1,1,T)

    # ignore_index = -1  -> per-element loss 0 ; mask tail lanes of partial tiles.
    valid = lab != -1
    if need_mask:
        lane = jax.lax.broadcasted_iota(jnp.int32, lab.shape, 2)
        valid = valid & ((j * tile_hw + lane) < hw_total)

    # Lane-dense elementwise accumulation (no per-step cross-lane reduction).
    acc_ref[...] += jnp.where(valid, nll * w, 0.0)

    # Epilogue: one cross-lane reduce per batch; broadcast the per-b partial sum
    # across a lane-dense 128-wide output row.
    @pl.when(j == nj - 1)
    def _():
        out_ref[...] = jnp.full(out_ref.shape, jnp.sum(acc_ref[...]), jnp.float32)


def weighted_ce_loss(logits_nchw, label_bhw, weight_bhw, *,
                     tile_hw=None, vmem_budget_bytes=12 * 1024 * 1024):
    """logits_nchw: (B, C, H, W) float32/bf16; label_bhw: (B, H, W) int (-1 = ignore);
    weight_bhw: (B, H, W) float.  Returns the scalar mean(nll * weight)."""
    B, C, H, W = logits_nchw.shape
    HW = H * W
    N = B * HW

    # Free reshapes (no transpose, no extra HBM traffic).
    logits3 = logits_nchw.reshape(B, C, HW)
    label3 = label_bhw.reshape(B, 1, HW).astype(jnp.int32)
    weight3 = weight_bhw.reshape(B, 1, HW).astype(jnp.float32)

    if tile_hw is None:
        # Dtype- and temporary-aware VMEM accounting (bytes per lane of tile width):
        #  * logits input buffer at its native dtype (sublane pad: 8 for f32, 16 bf16),
        #    double-buffered by the BlockSpec pipeline,
        #  * label + weight rows (8 sublanes, 4 B each), double-buffered,
        #  * ~3 simultaneously-live f32/int32 (c_pad x T) temporaries the kernel
        #    materializes (x.astype(f32), exp(x - m), iota/onehot),
        #  * the f32 accumulator scratch (single buffer).
        itemsize = jnp.dtype(logits_nchw.dtype).itemsize
        sub_in = max(8, 32 // max(1, itemsize))               # sublane packing for dtype
        c_pad_in = ((C + sub_in - 1) // sub_in) * sub_in
        c_pad_f32 = ((C + 7) // 8) * 8
        bytes_per_lane = (
            2 * (c_pad_in * itemsize + 2 * 8 * 4)             # double-buffered inputs
            + 3 * c_pad_f32 * 4                               # live f32/int32 temporaries
            + 4)                                              # accumulator
        t = (vmem_budget_bytes // bytes_per_lane) // 128 * 128
        t = max(t, 512)                           # keep rows >= 512 lanes when possible
        t = min(t, 8192)                          # amortization saturates well before this
        t = min(t, ((HW + 127) // 128) * 128)     # no point exceeding one full row
        tile_hw = max(t, 128)

    nj = pl.cdiv(HW, tile_hw)
    grid = (B, nj)
    need_mask = (HW % tile_hw) != 0

    kernel = functools.partial(
        _wce_kernel, hw_total=HW, tile_hw=tile_hw, need_mask=need_mask)

    # Per-batch partial sums (lane-dense).  Each b writes its own output block, so the
    # b axis can be split across TensorCores on v7x.
    partials = pl.pallas_call(
        kernel,
        out_shape=jax.ShapeDtypeStruct((B, 1, 128), jnp.float32),
        grid_spec=pltpu.PrefetchScalarGridSpec(
            num_scalar_prefetch=0,
            grid=grid,
            in_specs=[
                pl.BlockSpec((1, C, tile_hw), lambda b, j: (b, 0, j)),
                pl.BlockSpec((1, 1, tile_hw), lambda b, j: (b, 0, j)),
                pl.BlockSpec((1, 1, tile_hw), lambda b, j: (b, 0, j)),
            ],
            out_specs=pl.BlockSpec((1, 1, 128), lambda b, j: (b, 0, 0)),
            scratch_shapes=[pltpu.VMEM((1, 1, tile_hw), jnp.float32)],
        ),
        compiler_params=pltpu.CompilerParams(
            dimension_semantics=("parallel", "arbitrary"),
            # 32 MiB scoped VMEM is safe on every generation (v7x has only 64 MiB/TC).
            vmem_limit_bytes=32 * 1024 * 1024),
    )(logits3, label3, weight3)

    # Tiny final reduction over B partials + the 1/N scale stay in plain JAX.
    return jnp.sum(partials[:, 0, 0]) * jnp.float32(1.0 / N)


def weighted_ce_loss_ref(logits_nchw, label_bhw, weight_bhw):
    B, C, H, W = logits_nchw.shape
    logp = jax.nn.log_softmax(logits_nchw.astype(jnp.float32), axis=1)   # (B,C,H,W)
    onehot = jax.nn.one_hot(label_bhw, C, axis=1, dtype=logp.dtype)      # 0s for -1
    nll = -jnp.sum(logp * onehot, axis=1)                                # (B,H,W)
    nll = jnp.where(label_bhw == -1, 0.0, nll)
    return jnp.mean(nll * weight_bhw.astype(jnp.float32))


if __name__ == "__main__":
    key = jax.random.PRNGKey(0)
    k1, k2, k3, k4 = jax.random.split(key, 4)
    B, C, H, W = 2, 4, 16, 16

    logits = jax.random.normal(k1, (B, C, H, W), dtype=jnp.float32)
    label = jax.random.randint(k2, (B, H, W), 0, C, dtype=jnp.int32)
    # sprinkle some ignore_index = -1 labels
    label = jnp.where(jax.random.uniform(k4, (B, H, W)) < 0.1, -1, label)
    weight = jax.random.uniform(k3, (B, H, W), dtype=jnp.float32)

    # f32 path
    loss = weighted_ce_loss(logits, label, weight)
    loss = jax.block_until_ready(loss)
    ref = weighted_ce_loss_ref(logits, label, weight)
    assert jnp.allclose(loss, ref, rtol=1e-5, atol=1e-6), (loss, ref)

    # bf16 logits path (halves HBM read traffic; in-kernel math stays f32)
    logits_bf16 = logits.astype(jnp.bfloat16)
    loss_bf16 = jax.block_until_ready(weighted_ce_loss(logits_bf16, label, weight))
    ref_bf16 = weighted_ce_loss_ref(logits_bf16, label, weight)
    assert jnp.allclose(loss_bf16, ref_bf16, rtol=1e-3, atol=1e-4), (loss_bf16, ref_bf16)

    print("KERNEL_OK")
</pallas_src>

<mosaic_0001>
module attributes {stable_mosaic.version = 11 : i64} {
  func.func @_wce_kernel(%arg0: i32, %arg1: i32, %arg2: memref<1x4x256xf32, #tpu.memory_space<vmem>>, %arg3: memref<1x1x256xi32, #tpu.memory_space<vmem>>, %arg4: memref<1x1x256xf32, #tpu.memory_space<vmem>>, %arg5: memref<1x1x128xf32, #tpu.memory_space<vmem>>, %arg6: memref<1x1x256xf32, #tpu.memory_space<vmem>>) attributes {dimension_semantics = [#tpu.dimension_semantics<parallel>, #tpu.dimension_semantics<arbitrary>], iteration_bounds = array<i64: 2, 1>, scalar_prefetch = 0 : i64, scratch_operands = 1 : i64, tpu.core_type = #tpu.core_type<tc>, window_params = [{transform_indices = @transform_0, window_bounds = array<i64: 1, 4, 256>}, {transform_indices = @transform_1, window_bounds = array<i64: 1, 1, 256>}, {transform_indices = @transform_2, window_bounds = array<i64: 1, 1, 256>}, {transform_indices = @transform_3, window_bounds = array<i64: 1, 1, 128>}]} {
    %c0_i32 = arith.constant 0 : i32
    %0 = arith.cmpi eq, %arg1, %c0_i32 : i32
    %1 = arith.extui %0 : i1 to i32
    %c0_i32_0 = arith.constant 0 : i32
    %2 = arith.cmpi ne, %1, %c0_i32_0 : i32
    scf.if %2 {
      %cst_22 = arith.constant 0.000000e+00 : f32
      %36 = vector.broadcast %cst_22 : f32 to vector<1x1x256xf32>
      %c0_23 = arith.constant 0 : index
      %c0_24 = arith.constant 0 : index
      %c0_25 = arith.constant 0 : index
      %37 = vector.load %arg6[%c0_23, %c0_24, %c0_25] : memref<1x1x256xf32, #tpu.memory_space<vmem>>, vector<1x1x256xf32>
      tpu.vector_store %arg6[%c0_23, %c0_24, %c0_25], %36 {strides = array<i32>} : memref<1x1x256xf32, #tpu.memory_space<vmem>>, vector<1x1x256xf32>,
    } else {
    }
    %c0 = arith.constant 0 : index
    %c0_1 = arith.constant 0 : index
    %c0_2 = arith.constant 0 : index
    %3 = vector.load %arg2[%c0, %c0_1, %c0_2] : memref<1x4x256xf32, #tpu.memory_space<vmem>>, vector<1x4x256xf32>
    %c0_3 = arith.constant 0 : index
    %c0_4 = arith.constant 0 : index
    %c0_5 = arith.constant 0 : index
    %4 = vector.load %arg3[%c0_3, %c0_4, %c0_5] : memref<1x1x256xi32, #tpu.memory_space<vmem>>, vector<1x1x256xi32>
    %c0_6 = arith.constant 0 : index
    %c0_7 = arith.constant 0 : index
    %c0_8 = arith.constant 0 : index
    %5 = vector.load %arg4[%c0_6, %c0_7, %c0_8] : memref<1x1x256xf32, #tpu.memory_space<vmem>>, vector<1x1x256xf32>
    %cst = arith.constant dense<0xFF800000> : vector<1x256xf32>
    %6 = vector.multi_reduction <maximumf>, %3, %cst [1] : vector<1x4x256xf32> to vector<1x256xf32>
    %7 = vector.shape_cast %6 : vector<1x256xf32> to vector<1x1x256xf32>
    %8 = vector.broadcast %7 : vector<1x1x256xf32> to vector<1x4x256xf32>
    %9 = arith.subf %3, %8 : vector<1x4x256xf32>
    %10 = math.exp %9 : vector<1x4x256xf32>
    %cst_9 = arith.constant dense<0.000000e+00> : vector<1x256xf32>
    %11 = vector.multi_reduction <add>, %10, %cst_9 [1] : vector<1x4x256xf32> to vector<1x256xf32>
    %12 = vector.shape_cast %11 : vector<1x256xf32> to vector<1x1x256xf32>
    %13 = math.log %12 : vector<1x1x256xf32>
    %14 = tpu.iota {dimensions = array<i32: 1>} : vector<1x4x256xi32>
    %15 = vector.broadcast %4 : vector<1x1x256xi32> to vector<1x4x256xi32>
    %16 = arith.cmpi eq, %14, %15 : vector<1x4x256xi32>
    %cst_10 = arith.constant 0.000000e+00 : f32
    %17 = vector.broadcast %cst_10 : f32 to vector<1x4x256xf32>
    %18 = arith.select %16, %3, %17 : vector<1x4x256xi1>, vector<1x4x256xf32>
    %cst_11 = arith.constant dense<0.000000e+00> : vector<1x256xf32>
    %19 = vector.multi_reduction <add>, %18, %cst_11 [1] : vector<1x4x256xf32> to vector<1x256xf32>
    %20 = vector.shape_cast %19 : vector<1x256xf32> to vector<1x1x256xf32>
    %21 = arith.subf %20, %7 : vector<1x1x256xf32>
    %22 = arith.subf %21, %13 : vector<1x1x256xf32>
    %cst_12 = arith.constant 0.000000e+00 : f32
    %23 = vector.broadcast %cst_12 : f32 to vector<1x1x256xf32>
    %24 = arith.subf %23, %22 : vector<1x1x256xf32>
    %c-1_i32 = arith.constant -1 : i32
    %25 = vector.broadcast %c-1_i32 : i32 to vector<1x1x256xi32>
    %26 = arith.cmpi ne, %4, %25 : vector<1x1x256xi32>
    %c0_13 = arith.constant 0 : index
    %c0_14 = arith.constant 0 : index
    %c0_15 = arith.constant 0 : index
    %27 = vector.load %arg6[%c0_13, %c0_14, %c0_15] : memref<1x1x256xf32, #tpu.memory_space<vmem>>, vector<1x1x256xf32>
    %28 = arith.mulf %24, %5 : vector<1x1x256xf32>
    %cst_16 = arith.constant 0.000000e+00 : f32
    %29 = vector.broadcast %cst_16 : f32 to vector<1x1x256xf32>
    %30 = arith.select %26, %28, %29 : vector<1x1x256xi1>, vector<1x1x256xf32>
    %31 = arith.addf %27, %30 : vector<1x1x256xf32>
    %c0_17 = arith.constant 0 : index
    %c0_18 = arith.constant 0 : index
    %c0_19 = arith.constant 0 : index
    %32 = vector.load %arg6[%c0_17, %c0_18, %c0_19] : memref<1x1x256xf32, #tpu.memory_space<vmem>>, vector<1x1x256xf32>
    tpu.vector_store %arg6[%c0_17, %c0_18, %c0_19], %31 {strides = array<i32>} : memref<1x1x256xf32, #tpu.memory_space<vmem>>, vector<1x1x256xf32>,
    %c0_i32_20 = arith.constant 0 : i32
    %33 = arith.cmpi eq, %arg1, %c0_i32_20 : i32
    %34 = arith.extui %33 : i1 to i32
    %c0_i32_21 = arith.constant 0 : i32
    %35 = arith.cmpi ne, %34, %c0_i32_21 : i32
    scf.if %35 {
      %c0_22 = arith.constant 0 : index
      %c0_23 = arith.constant 0 : index
      %c0_24 = arith.constant 0 : index
      %36 = vector.load %arg6[%c0_22, %c0_23, %c0_24] : memref<1x1x256xf32, #tpu.memory_space<vmem>>, vector<1x1x256xf32>
      %37 = vector.shape_cast %36 : vector<1x1x256xf32> to vector<1x1x1x256xf32>
      %cst_25 = arith.constant dense<0.000000e+00> : vector<1xf32>
      %38 = vector.multi_reduction <add>, %37, %cst_25 [1, 2, 3] : vector<1x1x1x256xf32> to vector<1xf32>
      %39 = vector.shape_cast %38 : vector<1xf32> to vector<1x1x1x1xf32>
      %40 = vector.extract %39[0, 0, 0, 0] : f32 from vector<1x1x1x1xf32>
      %41 = vector.broadcast %40 : f32 to vector<1x1x128xf32>
      %c0_26 = arith.constant 0 : index
      %c0_27 = arith.constant 0 : index
      %c0_28 = arith.constant 0 : index
      %42 = vector.load %arg5[%c0_26, %c0_27, %c0_28] : memref<1x1x128xf32, #tpu.memory_space<vmem>>, vector<1x1x128xf32>
      tpu.vector_store %arg5[%c0_26, %c0_27, %c0_28], %41 {strides = array<i32>} : memref<1x1x128xf32, #tpu.memory_space<vmem>>, vector<1x1x128xf32>,
    } else {
    }
    return
  }
  func.func @transform_0(%arg0: i32, %arg1: i32) -> (i32, i32, i32) {
    %c0_i32 = arith.constant 0 : i32
    %c0_i32_0 = arith.constant 0 : i32
    return %arg0, %c0_i32, %arg1 : i32, i32, i32
  }
  func.func @transform_1(%arg0: i32, %arg1: i32) -> (i32, i32, i32) {
    %c0_i32 = arith.constant 0 : i32
    %c0_i32_0 = arith.constant 0 : i32
    return %arg0, %c0_i32, %arg1 : i32, i32, i32
  }
  func.func @transform_2(%arg0: i32, %arg1: i32) -> (i32, i32, i32) {
    %c0_i32 = arith.constant 0 : i32
    %c0_i32_0 = arith.constant 0 : i32
    return %arg0, %c0_i32, %arg1 : i32, i32, i32
  }
  func.func @transform_3(%arg0: i32, %arg1: i32) -> (i32, i32, i32) {
    %c0_i32 = arith.constant 0 : i32
    %c0_i32_0 = arith.constant 0 : i32
    %c0_i32_1 = arith.constant 0 : i32
    return %arg0, %c0_i32, %c0_i32_0 : i32, i32, i32
  }
}

</mosaic_0001>

<llo_original>
// kernel: tpu_custom_call.1
$region0: #{tpu_custom_call.1}
  #allocation0 [shape = 'u32[]', space=smem, size = 0x4, offset = 0x4, fixed_abs, tag = 'smem constant byte address 0x4 - core index']
  #allocation1 [shape = 'u32[144,128]{1,0:T(1,128)}', space=vmem, size = 0x12000, scoped, tag = 'internal scratch']
  #allocation2 [shape = 'f32[1,1,256]{2,1,0:T(1,128)}', space=vmem, size = 0x400, scoped, tag = 'scratch operand']
  %s0 = inlined_call_operand.hbm [shape: f32[2,4,256], index: 0, kind: input, shape index: {}]
  %s1 = inlined_call_operand.hbm [shape: s32[2,1,256], index: 1, kind: input, shape index: {}]
  %s2 = inlined_call_operand.vmem [shape: f32[2,1,256], index: 2, kind: input, shape index: {}]
  %s3 = inlined_call_operand.hbm [shape: f32[2,1,128], index: 3, kind: output, shape index: {}]
  %s4 = sld [smem:[#allocation0]]
  $region61: #{tpu_custom_call.1} parent=0
    _
  %s6 = ssub.s32 1, %s4
  %s7 = scalar_select 0, %s6, %s4
  $region1: #{tpu_custom_call.1} parent=0
    #allocation3 [shape = 'u8[8192]{0}', space=vmem, size = 0x2000, scoped, tag = 'input window, operand 0']
    #allocation4 [shape = 's32[2]{0}', space=sflag, size = 0x8, scoped, tag = 'scoped memory for tpu_custom_call.1']
    #allocation5 [shape = 's32[2]{0}', space=sflag, size = 0x8, scoped, tag = 'scoped memory for tpu_custom_call.1']
    #allocation6 [shape = 'u8[2048]{0}', space=vmem, size = 0x800, scoped, tag = 'input window, operand 1']
    #allocation7 [shape = 's32[2]{0}', space=sflag, size = 0x8, scoped, tag = 'scoped memory for tpu_custom_call.1']
    #allocation8 [shape = 'u8[1024]{0}', space=vmem, size = 0x400, scoped, tag = 'output window, operand 0']
    %8 = vsyncpa [#allocation4], 0
    %s9 = scalar_lea.sflag [#allocation4], 1
    %10 = vsyncpa %s9, 0
    %11 = vsyncpa [#allocation7], 0
    %s12 = scalar_lea.sflag [#allocation7], 1
    %13 = vsyncpa %s12, 0
    %14 = vsyncpa [#allocation5], 0
    %s15 = scalar_lea.sflag [#allocation5], 1
    %16 = vsyncpa %s15, 0
    loop: start=0, step=1, limit=4
    $region2: #{tpu_custom_call.1} parent=1 // loop_pre_header
      _
    $region3: #{tpu_custom_call.1} parent=1 // loop_header
      %s18 = sphi 0, %s22
      %p19 = scmp.ge.s32.totalorder %s18, 4
      %s25 = sphi 0, %s37
      %s26 = sphi 0, %s33
      %s27 = sphi 0, %s25
      %s28 = sphi 0, %s26
      %s29 = sphi 0, %s27
      %s30 = sphi 0, %s28
      %s42 = sphi 0, %s44
      %s45 = sphi 0, %s42
      %s46 = sphi 0, %s45
      %s62 = sphi 0, %s46
      %s70 = sphi 0, %s72
      %s73 = sphi 0, %s70
      %s74 = sphi 0, %s73
      %s90 = sphi 0, %s74
      %s98 = sphi 0, %s100
      %s101 = sphi 0, %s98
      %s102 = sphi 0, %s101
      %s118 = sphi 0, %s102
      %s124 = sphi 0, %s126
      %s127 = sphi 0, %s124
      %s128 = sphi 0, %s127
      %s144 = sphi 0, %s128
    $region4: #{tpu_custom_call.1} parent=1 // loop_header_branch
      %21 = sbr.rel (%p19) target = $region8
    $region5: #{tpu_custom_call.1} parent=1 // loop_body
      %s23 = ssub.s32 %s18, 1
      %s24 = ssub.s32 %s18, 2
      %s31 = sadd.s32 1, %s26
      %p32 = scmp.ge.s32.totalorder %s31, 1
      %s33 = scalar_select %p32, 0, %s31
      %s34 = sadd.s32 1, %s25
      %s35 = scalar_select %p32, %s34, %s25
      %p36 = scmp.ge.s32.totalorder %s35, 2
      %s37 = scalar_select %p36, 0, %s35
      %s38 = ssub.s32 %s25, %s37
      %s39 = ssub.s32 %s26, %s33
      %s40 = sor.u32 %s38, %s39
      %p41 = scmp.eq.s32.totalorder %s40, 0
      %s43 = sadd.s32 %s42, 1
      %s44 = scalar_select %p41, %s42, %s43
      %p47 = pneg %p41
      %p48 = scmp.eq.s32.totalorder %s18, 1
      %p49 = por %p47, %p48
      %p50 = scmp.ne.s32.totalorder %s42, %s45
      %p51 = scmp.eq.s32.totalorder %s18, 0
      %p52 = por %p50, %p51
      %p53 = scmp.ne.s32.totalorder %s42, %s45
      %p54 = scmp.eq.s32.totalorder %s23, 1
      %p55 = por %p53, %p54
      %p56 = scmp.ne.s32.totalorder %s45, %s46
      %p57 = scmp.eq.s32.totalorder %s23, 0
      %p58 = por %p56, %p57
      %p59 = scmp.ne.s32.totalorder %s45, %s46
      %p60 = scmp.eq.s32.totalorder %s24, 1
      %p61 = por %p59, %p60
      %p63 = scmp.ne.s32.totalorder %s46, %s62
      %p64 = scmp.eq.s32.totalorder %s24, 0
      %p65 = por %p63, %p64
      %s66 = ssub.s32 %s25, %s37
      %s67 = ssub.s32 %s26, %s33
      %s68 = sor.u32 %s66, %s67
      %p69 = scmp.eq.s32.totalorder %s68, 0
      %s71 = sadd.s32 %s70, 1
      %s72 = scalar_select %p69, %s70, %s71
      %p75 = pneg %p69
      %p76 = scmp.eq.s32.totalorder %s18, 1
      %p77 = por %p75, %p76
      %p78 = scmp.ne.s32.totalorder %s70, %s73
      %p79 = scmp.eq.s32.totalorder %s18, 0
      %p80 = por %p78, %p79
      %p81 = scmp.ne.s32.totalorder %s70, %s73
      %p82 = scmp.eq.s32.totalorder %s23, 1
      %p83 = por %p81, %p82
      %p84 = scmp.ne.s32.totalorder %s73, %s74
      %p85 = scmp.eq.s32.totalorder %s23, 0
      %p86 = por %p84, %p85
      %p87 = scmp.ne.s32.totalorder %s73, %s74
      %p88 = scmp.eq.s32.totalorder %s24, 1
      %p89 = por %p87, %p88
      %p91 = scmp.ne.s32.totalorder %s74, %s90
      %p92 = scmp.eq.s32.totalorder %s24, 0
      %p93 = por %p91, %p92
      %s94 = ssub.s32 %s25, %s37
      %s95 = ssub.s32 %s26, %s33
      %s96 = sor.u32 %s94, %s95
      %p97 = scmp.eq.s32.totalorder %s96, 0
      %s99 = sadd.s32 %s98, 1
      %s100 = scalar_select %p97, %s98, %s99
      %p103 = pneg %p97
      %p104 = scmp.eq.s32.totalorder %s18, 1
      %p105 = por %p103, %p104
      %p106 = scmp.ne.s32.totalorder %s98, %s101
      %p107 = scmp.eq.s32.totalorder %s18, 0
      %p108 = por %p106, %p107
      %p109 = scmp.ne.s32.totalorder %s98, %s101
      %p110 = scmp.eq.s32.totalorder %s23, 1
      %p111 = por %p109, %p110
      %p112 = scmp.ne.s32.totalorder %s101, %s102
      %p113 = scmp.eq.s32.totalorder %s23, 0
      %p114 = por %p112, %p113
      %p115 = scmp.ne.s32.totalorder %s101, %s102
      %p116 = scmp.eq.s32.totalorder %s24, 1
      %p117 = por %p115, %p116
      %p119 = scmp.ne.s32.totalorder %s102, %s118
      %p120 = scmp.eq.s32.totalorder %s24, 0
      %p121 = por %p119, %p120
      %s122 = ssub.s32 %s25, %s37
      %p123 = scmp.eq.s32.totalorder %s122, 0
      %s125 = sadd.s32 %s124, 1
      %s126 = scalar_select %p123, %s124, %s125
      %p129 = pneg %p123
      %p130 = scmp.eq.s32.totalorder %s18, 1
      %p131 = por %p129, %p130
      %p132 = scmp.ne.s32.totalorder %s124, %s127
      %p133 = scmp.eq.s32.totalorder %s18, 0
      %p134 = por %p132, %p133
      %p135 = scmp.ne.s32.totalorder %s124, %s127
      %p136 = scmp.eq.s32.totalorder %s23, 1
      %p137 = por %p135, %p136
      %p138 = scmp.ne.s32.totalorder %s127, %s128
      %p139 = scmp.eq.s32.totalorder %s23, 0
      %p140 = por %p138, %p139
      %p141 = scmp.ne.s32.totalorder %s127, %s128
      %p142 = scmp.eq.s32.totalorder %s24, 1
      %p143 = por %p141, %p142
      %p145 = scmp.ne.s32.totalorder %s128, %s144
      %p146 = scmp.eq.s32.totalorder %s24, 0
      %p147 = por %p145, %p146
      %p148 = scmp.le.s32.totalorder 1, %s18
      %p149 = scmp.lt.s32.totalorder %s18, 3
      %p150 = pnand %p148, %p149
      %p151 = pneg %p150
      // Predicated region
      $region9: #{tpu_custom_call.1} parent=5 // pred_check
        _
      $region10: #{tpu_custom_call.1} parent=5 // pred_check_branch
        %153 = sbr.rel (%p150) target = $region12
      $region11: #{tpu_custom_call.1} parent=5 // pred_region
        %s154 = ssub.s32 %s18, 1
      $region12: #{tpu_custom_call.1} parent=5 // pred_fallthru
        _
      %p155 = scmp.lt.s32.totalorder %s18, 2
      // Predicated region
      $region13: #{tpu_custom_call.1} parent=5 // pred_check
        %p156 = pneg %p155
      $region14: #{tpu_custom_call.1} parent=5 // pred_check_branch
        %158 = sbr.rel (%p156) target = $region16
      $region15: #{tpu_custom_call.1} parent=5 // pred_region
        // Predicated region
        $region17: #{tpu_custom_call.1} parent=15 // pred_check
          %p159 = pneg %p52
        $region18: #{tpu_custom_call.1} parent=15 // pred_check_branch
          %161 = sbr.rel (%p159) target = $region20
        $region19: #{tpu_custom_call.1} parent=15 // pred_region
          %s162 = sand.u32 %s42, 1
          %s163 = scalar_lea.sflag [#allocation4], %s162
          %s164 = sand.u32 %s42, 1
          %s165 = smul.addr %s164, 8
          %s166 = scalar_lea.vmem [#allocation3], %s165
          %s167 = smul.u32 2, %s26
          %s169 = ssub.s32 128, 128
          %170 = vsyncadd %s163, %s169
          %s171 = smul.addr %s25, 2
          %s172 = sadd.s32 %s167, %s171
          %s173 = smul.addr %s172, 64
          %s174 = scalar_lea.hbm %s0, %s173
          %s176 = sshll.u32 %s166, 4
          %s177 = int_to_ptr.vmem [resolvable:$true] %s176
          %179 = dma.hbm_to_vmem [thread:$0]  %s174, 128, %s177, %s163
        $region20: #{tpu_custom_call.1} parent=15 // pred_fallthru
          _
        // Predicated region
        $region21: #{tpu_custom_call.1} parent=15 // pred_check
          %p180 = pneg %p80
        $region22: #{tpu_custom_call.1} parent=15 // pred_check_branch
          %182 = sbr.rel (%p180) target = $region24
        $region23: #{tpu_custom_call.1} parent=15 // pred_region
          %s183 = sand.u32 %s70, 1
          %s184 = scalar_lea.sflag [#allocation7], %s183
          %s185 = sand.u32 %s70, 1
          %s186 = smul.addr %s185, 2
          %s187 = scalar_lea.vmem [#allocation6], %s186
          %s188 = smul.u32 2, %s26
          %s190 = ssub.s32 32, 32
          %191 = vsyncadd %s184, %s190
          %s192 = smul.addr %s25, 2
          %s193 = sadd.s32 %s188, %s192
          %s194 = smul.addr %s193, 16
          %s195 = scalar_lea.hbm %s1, %s194
          %s197 = sshll.u32 %s187, 4
          %s198 = int_to_ptr.vmem [resolvable:$true] %s197
          %200 = dma.hbm_to_vmem [thread:$0]  %s195, 32, %s198, %s184
        $region24: #{tpu_custom_call.1} parent=15 // pred_fallthru
          _
        // Predicated region
        $region25: #{tpu_custom_call.1} parent=15 // pred_check
          %p201 = pneg %p108
        $region26: #{tpu_custom_call.1} parent=15 // pred_check_branch
          %203 = sbr.rel (%p201) target = $region28
        $region27: #{tpu_custom_call.1} parent=15 // pred_region
          %s204 = smul.u32 2, %s26
          %p205 = scmp.lt.s32.totalorder %s25, 1
          %s206 = scalar_select %p205, %s25, 1
          %p207 = scmp.lt.s32.totalorder %s204, 1
          %s208 = scalar_select %p207, %s204, 1
          %s209 = smul.addr %s206, 2
          %s210 = sadd.s32 %s208, %s209
          %s211 = scalar_lea.vmem %s2, %s210
          %s212 = smul.u32 2, %s26
        $region28: #{tpu_custom_call.1} parent=15 // pred_fallthru
          _
      $region16: #{tpu_custom_call.1} parent=5 // pred_fallthru
        _
      %p213 = scmp.le.s32.totalorder 1, %s18
      %p214 = scmp.lt.s32.totalorder %s18, 3
      %p215 = pnand %p213, %p214
      %p216 = pneg %p215
      // Predicated region
      $region29: #{tpu_custom_call.1} parent=5 // pred_check
        _
      $region30: #{tpu_custom_call.1} parent=5 // pred_check_branch
        %218 = sbr.rel (%p215) target = $region32
      $region31: #{tpu_custom_call.1} parent=5 // pred_region
        %s219 = ssub.s32 %s18, 1
        %s220 = sand.u32 %s45, 1
        %s221 = scalar_lea.sflag [#allocation4], %s220
        %s222 = sand.u32 %s45, 1
        %s223 = smul.addr %s222, 8
        %s224 = scalar_lea.vmem [#allocation3], %s223
        // Predicated region
        $region33: #{tpu_custom_call.1} parent=31 // pred_check
          %p225 = pneg %p58
        $region34: #{tpu_custom_call.1} parent=31 // pred_check_branch
          %227 = sbr.rel (%p225) target = $region36
        $region35: #{tpu_custom_call.1} parent=31 // pred_region
          %228 = dma.done %s221, 128
        $region36: #{tpu_custom_call.1} parent=31 // pred_fallthru
          _
        %s229 = sand.u32 %s73, 1
        %s230 = scalar_lea.sflag [#allocation7], %s229
        %s231 = sand.u32 %s73, 1
        %s232 = smul.addr %s231, 2
        %s233 = scalar_lea.vmem [#allocation6], %s232
        // Predicated region
        $region37: #{tpu_custom_call.1} parent=31 // pred_check
          %p234 = pneg %p86
        $region38: #{tpu_custom_call.1} parent=31 // pred_check_branch
          %236 = sbr.rel (%p234) target = $region40
        $region39: #{tpu_custom_call.1} parent=31 // pred_region
          %237 = dma.done %s230, 32
        $region40: #{tpu_custom_call.1} parent=31 // pred_fallthru
          _
        %s238 = sand.u32 %s45, 1
        %s239 = scalar_lea.sflag [#allocation4], %s238
        %s240 = sand.u32 %s45, 1
        %s241 = smul.addr %s240, 8
        %s242 = scalar_lea.vmem [#allocation3], %s241
        %p243 = pneg %p58
        %p244 = pneg %p55
        %s245 = sand.u32 %s73, 1
        %s246 = scalar_lea.sflag [#allocation7], %s245
        %s247 = sand.u32 %s73, 1
        %s248 = smul.addr %s247, 2
        %s249 = scalar_lea.vmem [#allocation6], %s248
        %p250 = pneg %p86
        %p251 = pneg %p83
        %s252 = smul.u32 2, %s28
        %p253 = scmp.lt.s32.totalorder %s27, 1
        %s254 = scalar_select %p253, %s27, 1
        %p255 = scmp.lt.s32.totalorder %s252, 1
        %s256 = scalar_select %p255, %s252, 1
        %s257 = smul.addr %s254, 2
        %s258 = sadd.s32 %s256, %s257
        %s259 = scalar_lea.vmem %s2, %s258
        %p260 = pneg %p114
        %p261 = pneg %p111
        %p262 = pneg %p140
        %p263 = pneg %p137
        %s264 = sand.u32 %s127, 1
        %s265 = scalar_lea.sflag [#allocation5], %s264
        %s266 = sand.u32 %s127, 1
        %s267 = scalar_lea.vmem [#allocation8], %s266
        %s268 = smul.u32 2, %s28
        %s269 = smul.u32 2, %s28
        %s270 = smul.u32 2, %s28
        %p271 = scmp.lt.s32.totalorder %s27, 1
        %s272 = scalar_select %p271, %s27, 1
        %p273 = scmp.lt.s32.totalorder %s270, 1
        %s274 = scalar_select %p273, %s270, 1
        %s275 = smul.addr %s272, 2
        %s276 = sadd.s32 %s274, %s275
        %s277 = scalar_lea.vmem %s2, %s276
        %s278 = smul.u32 2, %s28
        %p279 = scmp.eq.s32.totalorder %s28, 0
        // Predicated region
        $region41: #{tpu_custom_call.1} parent=31 // pred_check
          %p280 = pneg %p279
        $region42: #{tpu_custom_call.1} parent=31 // pred_check_branch
          %282 = sbr.rel (%p280) target = $region44
        $region43: #{tpu_custom_call.1} parent=31 // pred_region
          %v283 = vlaneseq
          %vm284 = vcmp.ge.s32.totalorder %v283, 0
          %vm285 = vcmp.lt.s32.totalorder %v283, 256
          %vm286 = vmand %vm284, %vm285
          %287 = vst.msk [vmem:[#allocation2] sm:$0x3] %vm286, 0.0
        $region44: #{tpu_custom_call.1} parent=31 // pred_fallthru
          _
        %v288 = vld [vmem:[%s224] sm:$0xff]
        %v289 = vld [vmem:[%s233] sm:$0x3]
        %v290 = vld [vmem:[%s277] sm:$0x3]
        %v292 = vcombine.high %v288, %v288
        %vm294 = vcmask 1043456
        %v295 = vsel %vm294, %v288, -inf
        %v296 = vrot.slane %v295, 4
        %v297 = vmax.f32 %v295, %v296
        %v298 = vrot.slane %v297, 2
        %v299 = vmax.f32 %v297, %v298
        %v300 = vrot.slane %v299, 1
        %v301 = vmax.f32 %v299, %v300
        %v302 = vsel %vm294, %v292, -inf
        %v303 = vrot.slane %v302, 4
        %v304 = vmax.f32 %v302, %v303
        %v305 = vrot.slane %v304, 2
        %v306 = vmax.f32 %v304, %v305
        %v307 = vrot.slane %v306, 1
        %v308 = vmax.f32 %v306, %v307
        %v311 = vcombine.low %v301, %v308
        %v313 = vsub.f32 %v288, %v311
        %v314 = vmul.f32 %v313, 1.442695
        %v315 = vpow.pop %v314
        %v317 = vcombine.high %v315, %v315
        %v319 = vsel %vm294, %v315, 0.0
        %v320 = vrot.slane %v319, 4
        %v321 = vadd.f32 %v319, %v320
        %v322 = vrot.slane %v321, 2
        %v323 = vadd.f32 %v321, %v322
        %v324 = vrot.slane %v323, 1
        %v325 = vadd.f32 %v323, %v324
        %v326 = vsel %vm294, %v317, 0.0
        %v327 = vrot.slane %v326, 4
        %v328 = vadd.f32 %v326, %v327
        %v329 = vrot.slane %v328, 2
        %v330 = vadd.f32 %v328, %v329
        %v331 = vrot.slane %v330, 1
        %v332 = vadd.f32 %v330, %v331
        %v333 = vlog2.pop %v325
        %v334 = vmul.f32 %v333, 0.6931472
        %v335 = vlog2.pop %v332
        %v336 = vmul.f32 %v335, 0.6931472
        %v337 = vlaneseq
        %v338 = vshrl.u32 %v337, 7
        %v339 = vlaneseq
        %v340 = vshrl.u32 %v339, 7
        %v341 = vsub.s32 0, %v340
        %v342 = vrot.slane %v289, %v341
        %v343 = vlaneseq
        %v344 = vshrl.u32 %v343, 7
        %v345 = vsub.s32 1, %v344
        %v346 = vrot.slane %v289, %v345
        %vm347 = vcmp.eq.s32.totalorder %v338, %v342
        %vm348 = vcmp.eq.s32.totalorder %v338, %v346
        %v349 = vsel %vm347, %v288, 0.0
        %v350 = vsel %vm348, %v292, 0.0
        %v351 = vsel %vm294, %v349, 0.0
        %v352 = vrot.slane %v351, 4
        %v353 = vadd.f32 %v351, %v352
        %v354 = vrot.slane %v353, 2
        %v355 = vadd.f32 %v353, %v354
        %v356 = vrot.slane %v355, 1
        %v357 = vadd.f32 %v355, %v356
        %v358 = vsel %vm294, %v350, 0.0
        %v359 = vrot.slane %v358, 4
        %v360 = vadd.f32 %v358, %v359
        %v361 = vrot.slane %v360, 2
        %v362 = vadd.f32 %v360, %v361
        %v363 = vrot.slane %v362, 1
        %v364 = vadd.f32 %v362, %v363
        %v365 = vsub.f32 %v357, %v301
        %v366 = vsub.f32 %v364, %v308
        %v367 = vsub.f32 %v365, %v334
        %v368 = vsub.f32 %v366, %v336
        %v369 = vsub.f32 0.0, %v367
        %v370 = vsub.f32 0.0, %v368
        %vm371 = vcmp.ne.s32.totalorder %v289, 4294967295
        %v372 = vld [vmem:[#allocation2] sm:$0x3]
        %v374 = vlaneseq
        %v375 = vshrl.u32 %v374, 7
        %v376 = vsub.s32 0, %v375
        %v377 = vrot.slane %v290, %v376
        %v378 = vlaneseq
        %v379 = vshrl.u32 %v378, 7
        %v380 = vsub.s32 1, %v379
        %v381 = vrot.slane %v290, %v380
        %v384 = vmul.f32 %v369, %v377
        %v385 = vmul.f32 %v370, %v381
        %v388 = vcombine.low %v384, %v385
        %v390 = vunpack.c.l.s4 1966171168
        %v391 = vunpack.c.0.s8 %v390
        %v392 = vlaneseq
        %v393 = vshrl.u32 %v392, 7
        %v394 = vsub.s32 %v391, %v393
        %v395 = vrot.slane %v388, %v394
        %v397 = vunpack.c.l.s4 1966171168
        %v398 = vunpack.c.0.s8 %v397
        %v399 = vlaneseq
        %v400 = vshrl.u32 %v399, 7
        %v401 = vsub.s32 %v398, %v400
        %v402 = vrot.slane %v395, %v401
        %v404 = vsel %vm371, %v402, 0.0
        %v405 = vadd.f32 %v372, %v404
        %v406 = vlaneseq
        %vm407 = vcmp.ge.s32.totalorder %v406, 0
        %vm408 = vcmp.lt.s32.totalorder %v406, 256
        %vm409 = vmand %vm407, %vm408
        %410 = vst.msk [vmem:[#allocation2] sm:$0x3] %vm409, %v405
        // Predicated region
        $region45: #{tpu_custom_call.1} parent=31 // pred_check
          %p411 = pneg %p279
        $region46: #{tpu_custom_call.1} parent=31 // pred_check_branch
          %413 = sbr.rel (%p411) target = $region48
        $region47: #{tpu_custom_call.1} parent=31 // pred_region
          %v414 = vld [vmem:[#allocation2] sm:$0x3]
          %v416 = vlaneseq
          %v417 = vshrl.u32 %v416, 7
          %v418 = vsub.s32 0, %v417
          %v419 = vrot.slane %v414, %v418
          %v420 = vlaneseq
          %v421 = vshrl.u32 %v420, 7
          %v422 = vsub.s32 1, %v421
          %v423 = vrot.slane %v414, %v422
          %vm426 = vcmask 1040384
          %v427 = vsel %vm426, %v419, 0.0
          %v428 = vsel %vm426, %v423, 0.0
          %v429 = vadd.f32 %v427, %v428
          %430 = vadd.xlane.f32.xlu0 %v429
          %v431 = vpop.xlane.xlu0 %430
          %v432 = vrot.slane %v431, 4
          %v433 = vadd.f32 %v431, %v432
          %v434 = vrot.slane %v433, 2
          %v435 = vadd.f32 %v433, %v434
          %v436 = vrot.slane %v435, 1
          %v437 = vadd.f32 %v435, %v436
          %s438 = vtos %v437
          %v439 = vstv %s438
          %440 = vst [vmem:[%s267] sm:$0x1] %v439
        $region48: #{tpu_custom_call.1} parent=31 // pred_fallthru
          _
        %s441 = sand.u32 %s127, 1
        %s442 = scalar_lea.sflag [#allocation5], %s441
        %s443 = sand.u32 %s127, 1
        %s444 = scalar_lea.vmem [#allocation8], %s443
        // Predicated region
        $region49: #{tpu_custom_call.1} parent=31 // pred_check
          %p445 = pneg %p137
        $region50: #{tpu_custom_call.1} parent=31 // pred_check_branch
          %447 = sbr.rel (%p445) target = $region52
        $region51: #{tpu_custom_call.1} parent=31 // pred_region
          %s449 = ssub.s32 16, 16
          %450 = vsyncadd %s442, %s449
          %s451 = smul.addr %s27, 16
          %s452 = scalar_lea.hbm %s3, %s451
          %s454 = sshll.u32 %s444, 4
          %s455 = int_to_ptr.vmem [resolvable:$true] %s454
          %457 = dma.vmem_to_hbm [thread:$0]  %s455, 16, %s452, %s442
        $region52: #{tpu_custom_call.1} parent=31 // pred_fallthru
          _
      $region32: #{tpu_custom_call.1} parent=5 // pred_fallthru
        _
      %p458 = scmp.le.s32.totalorder 2, %s18
      // Predicated region
      $region53: #{tpu_custom_call.1} parent=5 // pred_check
        %p459 = pneg %p458
      $region54: #{tpu_custom_call.1} parent=5 // pred_check_branch
        %461 = sbr.rel (%p459) target = $region56
      $region55: #{tpu_custom_call.1} parent=5 // pred_region
        %s462 = ssub.s32 %s18, 2
        // Predicated region
        $region57: #{tpu_custom_call.1} parent=55 // pred_check
          %p463 = pneg %p143
        $region58: #{tpu_custom_call.1} parent=55 // pred_check_branch
          %465 = sbr.rel (%p463) target = $region60
        $region59: #{tpu_custom_call.1} parent=55 // pred_region
          %s466 = sand.u32 %s128, 1
          %s467 = scalar_lea.sflag [#allocation5], %s466
          %s468 = sand.u32 %s128, 1
          %s469 = scalar_lea.vmem [#allocation8], %s468
          %470 = dma.done %s467, 16
        $region60: #{tpu_custom_call.1} parent=55 // pred_fallthru
          _
      $region56: #{tpu_custom_call.1} parent=5 // pred_fallthru
        _
    $region6: #{tpu_custom_call.1} parent=1 // loop_footer
      %s22 = sadd.s32 1, %s18
    $region7: #{tpu_custom_call.1} parent=1 // loop_footer_branch
      %17 = sbr.rel target = $region3
    $region8: #{tpu_custom_call.1} parent=1 // loop_exit
      _
    %471 = vsyncpa [#allocation4], 1
    %s472 = scalar_lea.sflag [#allocation4], 1
    %473 = vsyncpa %s472, 1
    %474 = vsyncpa [#allocation7], 1
    %s475 = scalar_lea.sflag [#allocation7], 1
    %476 = vsyncpa %s475, 1
    %477 = vsyncpa [#allocation5], 1
    %s478 = scalar_lea.sflag [#allocation5], 1
    %479 = vsyncpa %s478, 1

</llo_original>
